<compile_context>
chip_gen: v7x
topology: tpu7x:2x2x1
jax: 0.10.0
libtpu: 0.0.40
codegen_flags: <defaults>
</compile_context>

<pallas_src>
import functools

import jax
import jax.numpy as jnp
import numpy as np
from jax.experimental import pallas as pl
from jax.experimental.pallas import tpu as pltpu


_TARGET_BLOCK_BYTES = 2 * 1024 * 1024  # ~2 MiB per operand block


def _pick_row_tile(Hb, row_group_bytes):
    """Output rows handled per grid step.

    Must be Hb itself, or a multiple of 8 dividing Hb (TPU (8,128) block-shape
    rule).  Pick the largest candidate whose block stays ~<=2 MiB so the
    pipeline keeps depth without blowing VMEM on any generation.
    """
    if Hb * row_group_bytes <= _TARGET_BLOCK_BYTES:
        return Hb
    divisors = [d for d in range(8, Hb, 8) if Hb % d == 0]
    if not divisors:
        return Hb
    fitting = [d for d in divisors if d * row_group_bytes <= _TARGET_BLOCK_BYTES]
    return max(fitting) if fitting else min(divisors)


def _compiler_params(block_bytes):
    kwargs = dict(dimension_semantics=("parallel", "parallel"))
    # in + out blocks, double-buffered, plus margin.
    need = 4 * block_bytes + (4 << 20)
    if need > (12 << 20):  # beyond the v5e default scoped VMEM limit
        kwargs["vmem_limit_bytes"] = int(need)
    return pltpu.CompilerParams(**kwargs)


# ----------------------------------------------------------------------------
# Primary path: NCHW end to end (no wrapper transposes).
# ----------------------------------------------------------------------------
def _psi_kernel_nchw(x_ref, o_ref, *, bs, C, th, Wb):
    # x_ref: (C, th*bs, W)   o_ref: (bs*bs*C, th, Wb)
    for i in range(bs):          # offset inside the height block
        for j in range(bs):      # offset inside the width block
            k = i * bs + j
            # Strided gather of phase (i, j); stored directly to its channel
            # block (no concatenate, no big resident intermediate).
            o_ref[pl.ds(k * C, C), :, :] = x_ref[
                :, pl.ds(i, th, stride=bs), pl.ds(j, Wb, stride=bs)
            ]


def _psi_nchw_pallas(x, bs):
    B, C, H, W = x.shape
    Hb, Wb = H // bs, W // bs
    itemsize = jnp.dtype(x.dtype).itemsize
    row_group_bytes = C * bs * W * itemsize      # bytes feeding one output row
    th = _pick_row_tile(Hb, row_group_bytes)
    grid = (B, Hb // th)

    kernel = functools.partial(_psi_kernel_nchw, bs=bs, C=C, th=th, Wb=Wb)
    return pl.pallas_call(
        kernel,
        out_shape=jax.ShapeDtypeStruct((B, bs * bs * C, Hb, Wb), x.dtype),
        grid_spec=pltpu.PrefetchScalarGridSpec(
            num_scalar_prefetch=0,
            grid=grid,
            in_specs=[pl.BlockSpec((None, C, th * bs, W),
                                   lambda b, t: (b, 0, t, 0))],
            out_specs=pl.BlockSpec((None, bs * bs * C, th, Wb),
                                   lambda b, t: (b, 0, t, 0)),
        ),
        compiler_params=_compiler_params(th * row_group_bytes),
    )(x)


# ----------------------------------------------------------------------------
# Fallback path: NHWC-staged (only sublane/outer-dim strides in the kernel).
# ----------------------------------------------------------------------------
def _psi_kernel_nhwc(x_ref, o_ref, *, bs, C, th, Wb):
    # x_ref: (th*bs, W, C)   o_ref: (th, Wb, bs*bs*C)
    for i in range(bs):
        for j in range(bs):
            k = i * bs + j
            o_ref[:, :, pl.ds(k * C, C)] = x_ref[
                pl.ds(i, th, stride=bs), pl.ds(j, Wb, stride=bs), :
            ]


def _psi_nhwc_pallas(x, bs):
    B, C, H, W = x.shape
    Hb, Wb = H // bs, W // bs
    itemsize = jnp.dtype(x.dtype).itemsize
    row_group_bytes = C * bs * W * itemsize
    th = _pick_row_tile(Hb, row_group_bytes)
    grid = (B, Hb // th)

    x_nhwc = jnp.transpose(x, (0, 2, 3, 1))      # unavoidable on this path
    kernel = functools.partial(_psi_kernel_nhwc, bs=bs, C=C, th=th, Wb=Wb)
    out_nhwc = pl.pallas_call(
        kernel,
        out_shape=jax.ShapeDtypeStruct((B, Hb, Wb, bs * bs * C), x.dtype),
        grid_spec=pltpu.PrefetchScalarGridSpec(
            num_scalar_prefetch=0,
            grid=grid,
            in_specs=[pl.BlockSpec((None, th * bs, W, C),
                                   lambda b, t: (b, t, 0, 0))],
            out_specs=pl.BlockSpec((None, th, Wb, bs * bs * C),
                                   lambda b, t: (b, t, 0, 0)),
        ),
        compiler_params=_compiler_params(th * row_group_bytes),
    )(x_nhwc)
    return jnp.transpose(out_nhwc, (0, 3, 1, 2))


# ----------------------------------------------------------------------------
# Reference + dispatch
# ----------------------------------------------------------------------------
def psi_reference(x, bs):
    """Pure-JAX transcription of the PyTorch forward, for verification."""
    b, c, h, w = x.shape
    x1 = x.reshape(b, c, h // bs, bs, w // bs, bs)
    x2 = jnp.transpose(x1, (0, 3, 5, 1, 2, 4))
    return x2.reshape(b, bs * bs * c, h // bs, w // bs)


@functools.lru_cache(maxsize=None)
def _nchw_path_ok(bs, dtype_name):
    """One-time probe: does the transpose-free NCHW kernel lower and run
    correctly here?  (Its lane-dim strided reads are the only feature not
    guaranteed on every Mosaic toolchain.)"""
    try:
        dtype = jnp.dtype(dtype_name)
        shape = (1, 3, 8 * bs, 8 * bs)
        n = int(np.prod(shape))
        probe = (jnp.arange(n, dtype=jnp.int32) % 509).astype(dtype).reshape(shape)
        got = jax.block_until_ready(_psi_nchw_pallas(probe, bs))
        want = psi_reference(probe, bs)
        return bool(np.array_equal(np.asarray(got), np.asarray(want)))
    except Exception:
        return False


def psi_pallas(x, block_size):
    """PyTorch-equivalent psi.forward (NCHW in, NCHW out)."""
    bs = int(block_size)
    B, C, H, W = x.shape
    if H % bs != 0 or W % bs != 0:
        raise ValueError("height and width must be divisible by block_size")
    # NOTE: for tiny tensors plain XLA (psi_reference) wins on per-call
    # overhead; we always take the Pallas path here so the kernel is exercised.
    if _nchw_path_ok(bs, jnp.dtype(x.dtype).name):
        return _psi_nchw_pallas(x, bs)
    return _psi_nhwc_pallas(x, bs)


if __name__ == "__main__":
    # Primary test: PyTorch NCHW convention (batch=2, channels=4, 16x16).
    block_size = 2
    key = jax.random.PRNGKey(0)
    x = jax.random.normal(key, (2, 4, 16, 16), dtype=jnp.float32)

    out = jax.block_until_ready(psi_pallas(x, block_size))
    ref = psi_reference(x, block_size)
    np.testing.assert_array_equal(np.asarray(out), np.asarray(ref))

    # Secondary test: non-power-of-two channels, rectangular image, bs=4.
    x2 = jax.random.normal(jax.random.PRNGKey(0), (2, 3, 32, 48),
                           dtype=jnp.float32)
    out2 = jax.block_until_ready(psi_pallas(x2, 4))
    ref2 = psi_reference(x2, 4)
    np.testing.assert_array_equal(np.asarray(out2), np.asarray(ref2))

    print("KERNEL_OK")
</pallas_src>

<mosaic_0001>
module attributes {stable_mosaic.version = 11 : i64} {
  func.func @_psi_kernel_nchw(%arg0: i32, %arg1: i32, %arg2: memref<1x3x16x16xf32, #tpu.memory_space<vmem>>, %arg3: memref<1x12x8x8xf32, #tpu.memory_space<vmem>>) attributes {dimension_semantics = [#tpu.dimension_semantics<parallel>, #tpu.dimension_semantics<parallel>], iteration_bounds = array<i64: 1, 1>, scalar_prefetch = 0 : i64, scratch_operands = 0 : i64, tpu.core_type = #tpu.core_type<tc>, window_params = [{transform_indices = @transform_0, window_bounds = array<i64: 1, 3, 16, 16>}, {transform_indices = @transform_1, window_bounds = array<i64: 1, 12, 8, 8>}]} {
    %c0 = arith.constant 0 : index
    %c0_0 = arith.constant 0 : index
    %c0_1 = arith.constant 0 : index
    %c0_2 = arith.constant 0 : index
    %0 = tpu.strided_load %arg2[%c0, %c0_0, %c0_1, %c0_2] {strides = array<i32: 1, 1, 2, 2>} : memref<1x3x16x16xf32, #tpu.memory_space<vmem>>, vector<1x3x8x8xf32>
    %1 = vector.shape_cast %0 : vector<1x3x8x8xf32> to vector<3x8x8xf32>
    %c0_3 = arith.constant 0 : index
    %c0_4 = arith.constant 0 : index
    %c0_5 = arith.constant 0 : index
    %c0_6 = arith.constant 0 : index
    %2 = vector.load %arg3[%c0_3, %c0_4, %c0_5, %c0_6] : memref<1x12x8x8xf32, #tpu.memory_space<vmem>>, vector<1x3x8x8xf32>
    %3 = vector.shape_cast %2 : vector<1x3x8x8xf32> to vector<3x8x8xf32>
    %4 = vector.shape_cast %1 : vector<3x8x8xf32> to vector<1x3x8x8xf32>
    tpu.vector_store %arg3[%c0_3, %c0_4, %c0_5, %c0_6], %4 {strides = array<i32>} : memref<1x12x8x8xf32, #tpu.memory_space<vmem>>, vector<1x3x8x8xf32>,
    %c0_7 = arith.constant 0 : index
    %c0_8 = arith.constant 0 : index
    %c0_9 = arith.constant 0 : index
    %c1 = arith.constant 1 : index
    %5 = tpu.strided_load %arg2[%c0_7, %c0_8, %c0_9, %c1] {strides = array<i32: 1, 1, 2, 2>} : memref<1x3x16x16xf32, #tpu.memory_space<vmem>>, vector<1x3x8x8xf32>
    %6 = vector.shape_cast %5 : vector<1x3x8x8xf32> to vector<3x8x8xf32>
    %c0_10 = arith.constant 0 : index
    %c3 = arith.constant 3 : index
    %c0_11 = arith.constant 0 : index
    %c0_12 = arith.constant 0 : index
    %7 = vector.load %arg3[%c0_10, %c3, %c0_11, %c0_12] : memref<1x12x8x8xf32, #tpu.memory_space<vmem>>, vector<1x3x8x8xf32>
    %8 = vector.shape_cast %7 : vector<1x3x8x8xf32> to vector<3x8x8xf32>
    %9 = vector.shape_cast %6 : vector<3x8x8xf32> to vector<1x3x8x8xf32>
    tpu.vector_store %arg3[%c0_10, %c3, %c0_11, %c0_12], %9 {strides = array<i32>} : memref<1x12x8x8xf32, #tpu.memory_space<vmem>>, vector<1x3x8x8xf32>,
    %c0_13 = arith.constant 0 : index
    %c0_14 = arith.constant 0 : index
    %c1_15 = arith.constant 1 : index
    %c0_16 = arith.constant 0 : index
    %10 = tpu.strided_load %arg2[%c0_13, %c0_14, %c1_15, %c0_16] {strides = array<i32: 1, 1, 2, 2>} : memref<1x3x16x16xf32, #tpu.memory_space<vmem>>, vector<1x3x8x8xf32>
    %11 = vector.shape_cast %10 : vector<1x3x8x8xf32> to vector<3x8x8xf32>
    %c0_17 = arith.constant 0 : index
    %c6 = arith.constant 6 : index
    %c0_18 = arith.constant 0 : index
    %c0_19 = arith.constant 0 : index
    %12 = vector.load %arg3[%c0_17, %c6, %c0_18, %c0_19] : memref<1x12x8x8xf32, #tpu.memory_space<vmem>>, vector<1x3x8x8xf32>
    %13 = vector.shape_cast %12 : vector<1x3x8x8xf32> to vector<3x8x8xf32>
    %14 = vector.shape_cast %11 : vector<3x8x8xf32> to vector<1x3x8x8xf32>
    tpu.vector_store %arg3[%c0_17, %c6, %c0_18, %c0_19], %14 {strides = array<i32>} : memref<1x12x8x8xf32, #tpu.memory_space<vmem>>, vector<1x3x8x8xf32>,
    %c0_20 = arith.constant 0 : index
    %c0_21 = arith.constant 0 : index
    %c1_22 = arith.constant 1 : index
    %c1_23 = arith.constant 1 : index
    %15 = tpu.strided_load %arg2[%c0_20, %c0_21, %c1_22, %c1_23] {strides = array<i32: 1, 1, 2, 2>} : memref<1x3x16x16xf32, #tpu.memory_space<vmem>>, vector<1x3x8x8xf32>
    %16 = vector.shape_cast %15 : vector<1x3x8x8xf32> to vector<3x8x8xf32>
    %c0_24 = arith.constant 0 : index
    %c9 = arith.constant 9 : index
    %c0_25 = arith.constant 0 : index
    %c0_26 = arith.constant 0 : index
    %17 = vector.load %arg3[%c0_24, %c9, %c0_25, %c0_26] : memref<1x12x8x8xf32, #tpu.memory_space<vmem>>, vector<1x3x8x8xf32>
    %18 = vector.shape_cast %17 : vector<1x3x8x8xf32> to vector<3x8x8xf32>
    %19 = vector.shape_cast %16 : vector<3x8x8xf32> to vector<1x3x8x8xf32>
    tpu.vector_store %arg3[%c0_24, %c9, %c0_25, %c0_26], %19 {strides = array<i32>} : memref<1x12x8x8xf32, #tpu.memory_space<vmem>>, vector<1x3x8x8xf32>,
    return
  }
  func.func @transform_0(%arg0: i32, %arg1: i32) -> (i32, i32, i32, i32) {
    %c0_i32 = arith.constant 0 : i32
    %c0_i32_0 = arith.constant 0 : i32
    %c0_i32_1 = arith.constant 0 : i32
    return %arg0, %c0_i32, %arg1, %c0_i32_0 : i32, i32, i32, i32
  }
  func.func @transform_1(%arg0: i32, %arg1: i32) -> (i32, i32, i32, i32) {
    %c0_i32 = arith.constant 0 : i32
    %c0_i32_0 = arith.constant 0 : i32
    %c0_i32_1 = arith.constant 0 : i32
    return %arg0, %c0_i32, %arg1, %c0_i32_0 : i32, i32, i32, i32
  }
}

module attributes {stable_mosaic.version = 11 : i64} {
  func.func @_psi_kernel_nhwc(%arg0: i32, %arg1: i32, %arg2: memref<1x16x16x4xf32, #tpu.memory_space<vmem>>, %arg3: memref<1x8x8x16xf32, #tpu.memory_space<vmem>>) attributes {dimension_semantics = [#tpu.dimension_semantics<parallel>, #tpu.dimension_semantics<parallel>], iteration_bounds = array<i64: 2, 1>, scalar_prefetch = 0 : i64, scratch_operands = 0 : i64, tpu.core_type = #tpu.core_type<tc>, window_params = [{transform_indices = @transform_0, window_bounds = array<i64: 1, 16, 16, 4>}, {transform_indices = @transform_1, window_bounds = array<i64: 1, 8, 8, 16>}]} {
    %c0 = arith.constant 0 : index
    %c0_0 = arith.constant 0 : index
    %c0_1 = arith.constant 0 : index
    %c0_2 = arith.constant 0 : index
    %0 = tpu.strided_load %arg2[%c0, %c0_0, %c0_1, %c0_2] {strides = array<i32: 1, 2, 2, 1>} : memref<1x16x16x4xf32, #tpu.memory_space<vmem>>, vector<1x8x8x4xf32>
    %1 = vector.shape_cast %0 : vector<1x8x8x4xf32> to vector<8x8x4xf32>
    %c0_3 = arith.constant 0 : index
    %c0_4 = arith.constant 0 : index
    %c0_5 = arith.constant 0 : index
    %c0_6 = arith.constant 0 : index
    %2 = vector.load %arg3[%c0_3, %c0_4, %c0_5, %c0_6] : memref<1x8x8x16xf32, #tpu.memory_space<vmem>>, vector<1x8x8x4xf32>
    %3 = vector.shape_cast %2 : vector<1x8x8x4xf32> to vector<8x8x4xf32>
    %4 = vector.shape_cast %1 : vector<8x8x4xf32> to vector<1x8x8x4xf32>
    tpu.vector_store %arg3[%c0_3, %c0_4, %c0_5, %c0_6], %4 {strides = array<i32>} : memref<1x8x8x16xf32, #tpu.memory_space<vmem>>, vector<1x8x8x4xf32>,
    %c0_7 = arith.constant 0 : index
    %c0_8 = arith.constant 0 : index
    %c1 = arith.constant 1 : index
    %c0_9 = arith.constant 0 : index
    %5 = tpu.strided_load %arg2[%c0_7, %c0_8, %c1, %c0_9] {strides = array<i32: 1, 2, 2, 1>} : memref<1x16x16x4xf32, #tpu.memory_space<vmem>>, vector<1x8x8x4xf32>
    %6 = vector.shape_cast %5 : vector<1x8x8x4xf32> to vector<8x8x4xf32>
    %c0_10 = arith.constant 0 : index
    %c0_11 = arith.constant 0 : index
    %c0_12 = arith.constant 0 : index
    %c4 = arith.constant 4 : index
    %7 = vector.load %arg3[%c0_10, %c0_11, %c0_12, %c4] : memref<1x8x8x16xf32, #tpu.memory_space<vmem>>, vector<1x8x8x4xf32>
    %8 = vector.shape_cast %7 : vector<1x8x8x4xf32> to vector<8x8x4xf32>
    %9 = vector.shape_cast %6 : vector<8x8x4xf32> to vector<1x8x8x4xf32>
    tpu.vector_store %arg3[%c0_10, %c0_11, %c0_12, %c4], %9 {strides = array<i32>} : memref<1x8x8x16xf32, #tpu.memory_space<vmem>>, vector<1x8x8x4xf32>,
    %c0_13 = arith.constant 0 : index
    %c1_14 = arith.constant 1 : index
    %c0_15 = arith.constant 0 : index
    %c0_16 = arith.constant 0 : index
    %10 = tpu.strided_load %arg2[%c0_13, %c1_14, %c0_15, %c0_16] {strides = array<i32: 1, 2, 2, 1>} : memref<1x16x16x4xf32, #tpu.memory_space<vmem>>, vector<1x8x8x4xf32>
    %11 = vector.shape_cast %10 : vector<1x8x8x4xf32> to vector<8x8x4xf32>
    %c0_17 = arith.constant 0 : index
    %c0_18 = arith.constant 0 : index
    %c0_19 = arith.constant 0 : index
    %c8 = arith.constant 8 : index
    %12 = vector.load %arg3[%c0_17, %c0_18, %c0_19, %c8] : memref<1x8x8x16xf32, #tpu.memory_space<vmem>>, vector<1x8x8x4xf32>
    %13 = vector.shape_cast %12 : vector<1x8x8x4xf32> to vector<8x8x4xf32>
    %14 = vector.shape_cast %11 : vector<8x8x4xf32> to vector<1x8x8x4xf32>
    tpu.vector_store %arg3[%c0_17, %c0_18, %c0_19, %c8], %14 {strides = array<i32>} : memref<1x8x8x16xf32, #tpu.memory_space<vmem>>, vector<1x8x8x4xf32>,
    %c0_20 = arith.constant 0 : index
    %c1_21 = arith.constant 1 : index
    %c1_22 = arith.constant 1 : index
    %c0_23 = arith.constant 0 : index
    %15 = tpu.strided_load %arg2[%c0_20, %c1_21, %c1_22, %c0_23] {strides = array<i32: 1, 2, 2, 1>} : memref<1x16x16x4xf32, #tpu.memory_space<vmem>>, vector<1x8x8x4xf32>
    %16 = vector.shape_cast %15 : vector<1x8x8x4xf32> to vector<8x8x4xf32>
    %c0_24 = arith.constant 0 : index
    %c0_25 = arith.constant 0 : index
    %c0_26 = arith.constant 0 : index
    %c12 = arith.constant 12 : index
    %17 = vector.load %arg3[%c0_24, %c0_25, %c0_26, %c12] : memref<1x8x8x16xf32, #tpu.memory_space<vmem>>, vector<1x8x8x4xf32>
    %18 = vector.shape_cast %17 : vector<1x8x8x4xf32> to vector<8x8x4xf32>
    %19 = vector.shape_cast %16 : vector<8x8x4xf32> to vector<1x8x8x4xf32>
    tpu.vector_store %arg3[%c0_24, %c0_25, %c0_26, %c12], %19 {strides = array<i32>} : memref<1x8x8x16xf32, #tpu.memory_space<vmem>>, vector<1x8x8x4xf32>,
    return
  }
  func.func @transform_0(%arg0: i32, %arg1: i32) -> (i32, i32, i32, i32) {
    %c0_i32 = arith.constant 0 : i32
    %c0_i32_0 = arith.constant 0 : i32
    %c0_i32_1 = arith.constant 0 : i32
    return %arg0, %arg1, %c0_i32, %c0_i32_0 : i32, i32, i32, i32
  }
  func.func @transform_1(%arg0: i32, %arg1: i32) -> (i32, i32, i32, i32) {
    %c0_i32 = arith.constant 0 : i32
    %c0_i32_0 = arith.constant 0 : i32
    %c0_i32_1 = arith.constant 0 : i32
    return %arg0, %arg1, %c0_i32, %c0_i32_0 : i32, i32, i32, i32
  }
}

</mosaic_0001>

<llo_original>
// kernel: tpu_custom_call.1
$region0: #{tpu_custom_call.1}
  #allocation0 [shape = 'u32[]', space=smem, size = 0x4, offset = 0x4, fixed_abs, tag = 'smem constant byte address 0x4 - core index']
  #allocation1 [shape = 'u32[144,128]{1,0:T(1,128)}', space=vmem, size = 0x12000, scoped, tag = 'internal scratch']
  %s0 = inlined_call_operand.vmem [shape: f32[2,16,16,4], index: 0, kind: input, shape index: {}]
  %s1 = inlined_call_operand.hbm [shape: f32[2,8,8,16], index: 1, kind: output, shape index: {}]
  %s2 = sld [smem:[#allocation0]]
  $region37: #{tpu_custom_call.1} parent=0
    _
  %s4 = ssub.s32 1, %s2
  %s5 = scalar_select 0, %s4, %s2
  $region1: #{tpu_custom_call.1} parent=0
    #allocation2 [shape = 'u8[65536]{0}', space=vmem, size = 0x10000, scoped, tag = 'output window, operand 0']
    #allocation3 [shape = 's32[2]{0}', space=sflag, size = 0x8, scoped, tag = 'scoped memory for tpu_custom_call.1']
    %6 = vsyncpa [#allocation3], 0
    %s7 = scalar_lea.sflag [#allocation3], 1
    %8 = vsyncpa %s7, 0
    loop: start=0, step=1, limit=4
    $region2: #{tpu_custom_call.1} parent=1 // loop_pre_header
      _
    $region3: #{tpu_custom_call.1} parent=1 // loop_header
      %s10 = sphi 0, %s14
      %p11 = scmp.ge.s32.totalorder %s10, 4
      %s17 = sphi 0, %s29
      %s18 = sphi 0, %s25
      %s19 = sphi 0, %s17
      %s20 = sphi 0, %s18
      %s21 = sphi 0, %s19
      %s22 = sphi 0, %s20
      %s34 = sphi 0, %s36
      %s37 = sphi 0, %s34
      %s38 = sphi 0, %s37
      %s54 = sphi 0, %s38
      %s62 = sphi 0, %s64
      %s65 = sphi 0, %s62
      %s66 = sphi 0, %s65
      %s82 = sphi 0, %s66
    $region4: #{tpu_custom_call.1} parent=1 // loop_header_branch
      %13 = sbr.rel (%p11) target = $region8
    $region5: #{tpu_custom_call.1} parent=1 // loop_body
      %s15 = ssub.s32 %s10, 1
      %s16 = ssub.s32 %s10, 2
      %s23 = sadd.s32 1, %s18
      %p24 = scmp.ge.s32.totalorder %s23, 1
      %s25 = scalar_select %p24, 0, %s23
      %s26 = sadd.s32 1, %s17
      %s27 = scalar_select %p24, %s26, %s17
      %p28 = scmp.ge.s32.totalorder %s27, 2
      %s29 = scalar_select %p28, 0, %s27
      %s30 = ssub.s32 %s17, %s29
      %s31 = ssub.s32 %s18, %s25
      %s32 = sor.u32 %s30, %s31
      %p33 = scmp.eq.s32.totalorder %s32, 0
      %s35 = sadd.s32 %s34, 1
      %s36 = scalar_select %p33, %s34, %s35
      %p39 = pneg %p33
      %p40 = scmp.eq.s32.totalorder %s10, 1
      %p41 = por %p39, %p40
      %p42 = scmp.ne.s32.totalorder %s34, %s37
      %p43 = scmp.eq.s32.totalorder %s10, 0
      %p44 = por %p42, %p43
      %p45 = scmp.ne.s32.totalorder %s34, %s37
      %p46 = scmp.eq.s32.totalorder %s15, 1
      %p47 = por %p45, %p46
      %p48 = scmp.ne.s32.totalorder %s37, %s38
      %p49 = scmp.eq.s32.totalorder %s15, 0
      %p50 = por %p48, %p49
      %p51 = scmp.ne.s32.totalorder %s37, %s38
      %p52 = scmp.eq.s32.totalorder %s16, 1
      %p53 = por %p51, %p52
      %p55 = scmp.ne.s32.totalorder %s38, %s54
      %p56 = scmp.eq.s32.totalorder %s16, 0
      %p57 = por %p55, %p56
      %s58 = ssub.s32 %s17, %s29
      %s59 = ssub.s32 %s18, %s25
      %s60 = sor.u32 %s58, %s59
      %p61 = scmp.eq.s32.totalorder %s60, 0
      %s63 = sadd.s32 %s62, 1
      %s64 = scalar_select %p61, %s62, %s63
      %p67 = pneg %p61
      %p68 = scmp.eq.s32.totalorder %s10, 1
      %p69 = por %p67, %p68
      %p70 = scmp.ne.s32.totalorder %s62, %s65
      %p71 = scmp.eq.s32.totalorder %s10, 0
      %p72 = por %p70, %p71
      %p73 = scmp.ne.s32.totalorder %s62, %s65
      %p74 = scmp.eq.s32.totalorder %s15, 1
      %p75 = por %p73, %p74
      %p76 = scmp.ne.s32.totalorder %s65, %s66
      %p77 = scmp.eq.s32.totalorder %s15, 0
      %p78 = por %p76, %p77
      %p79 = scmp.ne.s32.totalorder %s65, %s66
      %p80 = scmp.eq.s32.totalorder %s16, 1
      %p81 = por %p79, %p80
      %p83 = scmp.ne.s32.totalorder %s66, %s82
      %p84 = scmp.eq.s32.totalorder %s16, 0
      %p85 = por %p83, %p84
      %p86 = scmp.le.s32.totalorder 1, %s10
      %p87 = scmp.lt.s32.totalorder %s10, 3
      %p88 = pnand %p86, %p87
      %p89 = pneg %p88
      // Predicated region
      $region9: #{tpu_custom_call.1} parent=5 // pred_check
        _
      $region10: #{tpu_custom_call.1} parent=5 // pred_check_branch
        %91 = sbr.rel (%p88) target = $region12
      $region11: #{tpu_custom_call.1} parent=5 // pred_region
        %s92 = ssub.s32 %s10, 1
      $region12: #{tpu_custom_call.1} parent=5 // pred_fallthru
        _
      %p93 = scmp.lt.s32.totalorder %s10, 2
      // Predicated region
      $region13: #{tpu_custom_call.1} parent=5 // pred_check
        %p94 = pneg %p93
      $region14: #{tpu_custom_call.1} parent=5 // pred_check_branch
        %96 = sbr.rel (%p94) target = $region16
      $region15: #{tpu_custom_call.1} parent=5 // pred_region
        // Predicated region
        $region17: #{tpu_custom_call.1} parent=15 // pred_check
          %p97 = pneg %p44
        $region18: #{tpu_custom_call.1} parent=15 // pred_check_branch
          %99 = sbr.rel (%p97) target = $region20
        $region19: #{tpu_custom_call.1} parent=15 // pred_region
          %s100 = smul.u32 16, %s18
          %p101 = scmp.lt.s32.totalorder %s17, 1
          %s102 = scalar_select %p101, %s17, 1
          %p103 = scmp.lt.s32.totalorder %s100, 15
          %s104 = scalar_select %p103, %s100, 15
          %s105 = smul.addr %s104, 2
          %s106 = smul.addr %s102, 32
          %s107 = sadd.s32 %s105, %s106
          %s108 = smul.addr %s107, 8
          %s109 = scalar_lea.vmem %s0, %s108
          %s110 = smul.u32 16, %s18
        $region20: #{tpu_custom_call.1} parent=15 // pred_fallthru
          _
      $region16: #{tpu_custom_call.1} parent=5 // pred_fallthru
        _
      %p111 = scmp.le.s32.totalorder 1, %s10
      %p112 = scmp.lt.s32.totalorder %s10, 3
      %p113 = pnand %p111, %p112
      %p114 = pneg %p113
      // Predicated region
      $region21: #{tpu_custom_call.1} parent=5 // pred_check
        _
      $region22: #{tpu_custom_call.1} parent=5 // pred_check_branch
        %116 = sbr.rel (%p113) target = $region24
      $region23: #{tpu_custom_call.1} parent=5 // pred_region
        %s117 = ssub.s32 %s10, 1
        %s118 = smul.u32 16, %s20
        %p119 = scmp.lt.s32.totalorder %s19, 1
        %s120 = scalar_select %p119, %s19, 1
        %p121 = scmp.lt.s32.totalorder %s118, 15
        %s122 = scalar_select %p121, %s118, 15
        %s123 = smul.addr %s122, 2
        %s124 = smul.addr %s120, 32
        %s125 = sadd.s32 %s123, %s124
        %s126 = smul.addr %s125, 8
        %s127 = scalar_lea.vmem %s0, %s126
        %p128 = pneg %p50
        %p129 = pneg %p47
        %p130 = pneg %p78
        %p131 = pneg %p75
        %s132 = sand.u32 %s65, 1
        %s133 = scalar_lea.sflag [#allocation3], %s132
        %s134 = sand.u32 %s65, 1
        %s135 = smul.addr %s134, 64
        %s136 = scalar_lea.vmem [#allocation2], %s135
        %s137 = smul.u32 16, %s20
        %p138 = scmp.lt.s32.totalorder %s19, 1
        %s139 = scalar_select %p138, %s19, 1
        %p140 = scmp.lt.s32.totalorder %s137, 15
        %s141 = scalar_select %p140, %s137, 15
        %s142 = smul.addr %s141, 2
        %s143 = smul.addr %s139, 32
        %s144 = sadd.s32 %s142, %s143
        %s145 = smul.addr %s144, 8
        %s146 = scalar_lea.vmem %s0, %s145
        %s147 = smul.u32 16, %s20
        %s148 = smul.u32 8, %s20
        %v149 = vld [vmem:[%s146] ss:$2 sm:$0xff]
        %s150 = scalar_lea.vmem %s146, 32
        %v151 = vld [vmem:[%s150] ss:$2 sm:$0xff]
        %s152 = scalar_lea.vmem %s146, 64
        %v153 = vld [vmem:[%s152] ss:$2 sm:$0xff]
        %s154 = scalar_lea.vmem %s146, 96
        %v155 = vld [vmem:[%s154] ss:$2 sm:$0xff]
        %s156 = scalar_lea.vmem %s146, 128
        %v157 = vld [vmem:[%s156] ss:$2 sm:$0xff]
        %s158 = scalar_lea.vmem %s146, 160
        %v159 = vld [vmem:[%s158] ss:$2 sm:$0xff]
        %s160 = scalar_lea.vmem %s146, 192
        %v161 = vld [vmem:[%s160] ss:$2 sm:$0xff]
        %s162 = scalar_lea.vmem %s146, 224
        %v163 = vld [vmem:[%s162] ss:$2 sm:$0xff]
        %vm164 = vcmask 31744
        %165 = vst.msk [vmem:[%s136] sm:$0xff] %vm164, %v149
        %166 = vst.msk [vmem:[%s136 + $0x8] sm:$0xff] %vm164, %v151
        %167 = vst.msk [vmem:[%s136 + $0x10] sm:$0xff] %vm164, %v153
        %168 = vst.msk [vmem:[%s136 + $0x18] sm:$0xff] %vm164, %v155
        %169 = vst.msk [vmem:[%s136 + $0x20] sm:$0xff] %vm164, %v157
        %170 = vst.msk [vmem:[%s136 + $0x28] sm:$0xff] %vm164, %v159
        %171 = vst.msk [vmem:[%s136 + $0x30] sm:$0xff] %vm164, %v161
        %172 = vst.msk [vmem:[%s136 + $0x38] sm:$0xff] %vm164, %v163
        %s173 = scalar_lea.vmem %s146, 1
        %v174 = vld [vmem:[%s173] ss:$2 sm:$0xff]
        %s175 = scalar_lea.vmem %s146, 33
        %v176 = vld [vmem:[%s175] ss:$2 sm:$0xff]
        %s177 = scalar_lea.vmem %s146, 65
        %v178 = vld [vmem:[%s177] ss:$2 sm:$0xff]
        %s179 = scalar_lea.vmem %s146, 97
        %v180 = vld [vmem:[%s179] ss:$2 sm:$0xff]
        %s181 = scalar_lea.vmem %s146, 129
        %v182 = vld [vmem:[%s181] ss:$2 sm:$0xff]
        %s183 = scalar_lea.vmem %s146, 161
        %v184 = vld [vmem:[%s183] ss:$2 sm:$0xff]
        %s185 = scalar_lea.vmem %s146, 193
        %v186 = vld [vmem:[%s185] ss:$2 sm:$0xff]
        %s187 = scalar_lea.vmem %s146, 225
        %v188 = vld [vmem:[%s187] ss:$2 sm:$0xff]
        %197 = vrot.lane.b32.xlu0 %v174, 4
        %v198 = vpop.permute.xlu0 %197
        %199 = vrot.lane.b32.xlu0 %v176, 4
        %v200 = vpop.permute.xlu0 %199
        %201 = vrot.lane.b32.xlu0 %v178, 4
        %v202 = vpop.permute.xlu0 %201
        %203 = vrot.lane.b32.xlu0 %v180, 4
        %v204 = vpop.permute.xlu0 %203
        %205 = vrot.lane.b32.xlu0 %v182, 4
        %v206 = vpop.permute.xlu0 %205
        %207 = vrot.lane.b32.xlu0 %v184, 4
        %v208 = vpop.permute.xlu0 %207
        %209 = vrot.lane.b32.xlu0 %v186, 4
        %v210 = vpop.permute.xlu0 %209
        %211 = vrot.lane.b32.xlu0 %v188, 4
        %v212 = vpop.permute.xlu0 %211
        %vm221 = vcmask 64544
        %222 = vst.msk [vmem:[%s136] sm:$0xff] %vm221, %v198
        %223 = vst.msk [vmem:[%s136 + $0x8] sm:$0xff] %vm221, %v200
        %224 = vst.msk [vmem:[%s136 + $0x10] sm:$0xff] %vm221, %v202
        %225 = vst.msk [vmem:[%s136 + $0x18] sm:$0xff] %vm221, %v204
        %226 = vst.msk [vmem:[%s136 + $0x20] sm:$0xff] %vm221, %v206
        %227 = vst.msk [vmem:[%s136 + $0x28] sm:$0xff] %vm221, %v208
        %228 = vst.msk [vmem:[%s136 + $0x30] sm:$0xff] %vm221, %v210
        %229 = vst.msk [vmem:[%s136 + $0x38] sm:$0xff] %vm221, %v212
        %s230 = scalar_lea.vmem %s146, 16
        %v231 = vld [vmem:[%s230] ss:$2 sm:$0xff]
        %s232 = scalar_lea.vmem %s230, 32
        %v233 = vld [vmem:[%s232] ss:$2 sm:$0xff]
        %s234 = scalar_lea.vmem %s230, 64
        %v235 = vld [vmem:[%s234] ss:$2 sm:$0xff]
        %s236 = scalar_lea.vmem %s230, 96
        %v237 = vld [vmem:[%s236] ss:$2 sm:$0xff]
        %s238 = scalar_lea.vmem %s230, 128
        %v239 = vld [vmem:[%s238] ss:$2 sm:$0xff]
        %s240 = scalar_lea.vmem %s230, 160
        %v241 = vld [vmem:[%s240] ss:$2 sm:$0xff]
        %s242 = scalar_lea.vmem %s230, 192
        %v243 = vld [vmem:[%s242] ss:$2 sm:$0xff]
        %s244 = scalar_lea.vmem %s230, 224
        %v245 = vld [vmem:[%s244] ss:$2 sm:$0xff]
        %254 = vrot.lane.b32.xlu0 %v231, 8
        %v255 = vpop.permute.xlu0 %254
        %256 = vrot.lane.b32.xlu0 %v233, 8
        %v257 = vpop.permute.xlu0 %256
        %258 = vrot.lane.b32.xlu0 %v235, 8
        %v259 = vpop.permute.xlu0 %258
        %260 = vrot.lane.b32.xlu0 %v237, 8
        %v261 = vpop.permute.xlu0 %260
        %262 = vrot.lane.b32.xlu0 %v239, 8
        %v263 = vpop.permute.xlu0 %262
        %264 = vrot.lane.b32.xlu0 %v241, 8
        %v265 = vpop.permute.xlu0 %264
        %266 = vrot.lane.b32.xlu0 %v243, 8
        %v267 = vpop.permute.xlu0 %266
        %268 = vrot.lane.b32.xlu0 %v245, 8
        %v269 = vpop.permute.xlu0 %268
        %vm278 = vcmask 97344
        %279 = vst.msk [vmem:[%s136] sm:$0xff] %vm278, %v255
        %280 = vst.msk [vmem:[%s136 + $0x8] sm:$0xff] %vm278, %v257
        %281 = vst.msk [vmem:[%s136 + $0x10] sm:$0xff] %vm278, %v259
        %282 = vst.msk [vmem:[%s136 + $0x18] sm:$0xff] %vm278, %v261
        %283 = vst.msk [vmem:[%s136 + $0x20] sm:$0xff] %vm278, %v263
        %284 = vst.msk [vmem:[%s136 + $0x28] sm:$0xff] %vm278, %v265
        %285 = vst.msk [vmem:[%s136 + $0x30] sm:$0xff] %vm278, %v267
        %286 = vst.msk [vmem:[%s136 + $0x38] sm:$0xff] %vm278, %v269
        %s287 = scalar_lea.vmem %s230, 1
        %v288 = vld [vmem:[%s287] ss:$2 sm:$0xff]
        %s289 = scalar_lea.vmem %s230, 33
        %v290 = vld [vmem:[%s289] ss:$2 sm:$0xff]
        %s291 = scalar_lea.vmem %s230, 65
        %v292 = vld [vmem:[%s291] ss:$2 sm:$0xff]
        %s293 = scalar_lea.vmem %s230, 97
        %v294 = vld [vmem:[%s293] ss:$2 sm:$0xff]
        %s295 = scalar_lea.vmem %s230, 129
        %v296 = vld [vmem:[%s295] ss:$2 sm:$0xff]
        %s297 = scalar_lea.vmem %s230, 161
        %v298 = vld [vmem:[%s297] ss:$2 sm:$0xff]
        %s299 = scalar_lea.vmem %s230, 193
        %v300 = vld [vmem:[%s299] ss:$2 sm:$0xff]
        %s301 = scalar_lea.vmem %s230, 225
        %v302 = vld [vmem:[%s301] ss:$2 sm:$0xff]
        %311 = vrot.lane.b32.xlu0 %v288, 12
        %v312 = vpop.permute.xlu0 %311
        %313 = vrot.lane.b32.xlu0 %v290, 12
        %v314 = vpop.permute.xlu0 %313
        %315 = vrot.lane.b32.xlu0 %v292, 12
        %v316 = vpop.permute.xlu0 %315
        %317 = vrot.lane.b32.xlu0 %v294, 12
        %v318 = vpop.permute.xlu0 %317
        %319 = vrot.lane.b32.xlu0 %v296, 12
        %v320 = vpop.permute.xlu0 %319
        %321 = vrot.lane.b32.xlu0 %v298, 12
        %v322 = vpop.permute.xlu0 %321
        %323 = vrot.lane.b32.xlu0 %v300, 12
        %v324 = vpop.permute.xlu0 %323
        %325 = vrot.lane.b32.xlu0 %v302, 12
        %v326 = vpop.permute.xlu0 %325
        %vm335 = vcmask 130144
        %336 = vst.msk [vmem:[%s136] sm:$0xff] %vm335, %v312
        %337 = vst.msk [vmem:[%s136 + $0x8] sm:$0xff] %vm335, %v314
        %338 = vst.msk [vmem:[%s136 + $0x10] sm:$0xff] %vm335, %v316
        %339 = vst.msk [vmem:[%s136 + $0x18] sm:$0xff] %vm335, %v318
        %340 = vst.msk [vmem:[%s136 + $0x20] sm:$0xff] %vm335, %v320
        %341 = vst.msk [vmem:[%s136 + $0x28] sm:$0xff] %vm335, %v322
        %342 = vst.msk [vmem:[%s136 + $0x30] sm:$0xff] %vm335, %v324
        %343 = vst.msk [vmem:[%s136 + $0x38] sm:$0xff] %vm335, %v326
        %s344 = sand.u32 %s65, 1
        %s345 = scalar_lea.sflag [#allocation3], %s344
        %s346 = sand.u32 %s65, 1
        %s347 = smul.addr %s346, 64
        %s348 = scalar_lea.vmem [#allocation2], %s347
        // Predicated region
        $region25: #{tpu_custom_call.1} parent=23 // pred_check
          %p349 = pneg %p75
        $region26: #{tpu_custom_call.1} parent=23 // pred_check_branch
          %351 = sbr.rel (%p349) target = $region28
        $region27: #{tpu_custom_call.1} parent=23 // pred_region
          %s352 = smul.u32 8, %s20
          %s354 = ssub.s32 1024, 1024
          %355 = vsyncadd %s345, %s354
          %s356 = smul.addr %s19, 8
          %s357 = sadd.s32 %s352, %s356
          %s358 = smul.addr %s357, 128
          %s359 = scalar_lea.hbm %s1, %s358
          %s360 = sshll.u32 %s348, 4
          %s361 = int_to_ptr.vmem [resolvable:$true] %s360
          %366 = dma.vmem_to_hbm [thread:$0]  %s361, 1024, %s359, %s345, 128, 128, 8
        $region28: #{tpu_custom_call.1} parent=23 // pred_fallthru
          _
      $region24: #{tpu_custom_call.1} parent=5 // pred_fallthru
        _
      %p367 = scmp.le.s32.totalorder 2, %s10
      // Predicated region
      $region29: #{tpu_custom_call.1} parent=5 // pred_check
        %p368 = pneg %p367
      $region30: #{tpu_custom_call.1} parent=5 // pred_check_branch
        %370 = sbr.rel (%p368) target = $region32
      $region31: #{tpu_custom_call.1} parent=5 // pred_region
        %s371 = ssub.s32 %s10, 2
        // Predicated region
        $region33: #{tpu_custom_call.1} parent=31 // pred_check
          %p372 = pneg %p81
        $region34: #{tpu_custom_call.1} parent=31 // pred_check_branch
          %374 = sbr.rel (%p372) target = $region36
        $region35: #{tpu_custom_call.1} parent=31 // pred_region
          %s375 = sand.u32 %s66, 1
          %s376 = scalar_lea.sflag [#allocation3], %s375
          %s377 = sand.u32 %s66, 1
          %s378 = smul.addr %s377, 64
          %s379 = scalar_lea.vmem [#allocation2], %s378
          %380 = dma.done %s376, 1024
        $region36: #{tpu_custom_call.1} parent=31 // pred_fallthru
          _
      $region32: #{tpu_custom_call.1} parent=5 // pred_fallthru
        _
    $region6: #{tpu_custom_call.1} parent=1 // loop_footer
      %s14 = sadd.s32 1, %s10
    $region7: #{tpu_custom_call.1} parent=1 // loop_footer_branch
      %9 = sbr.rel target = $region3
    $region8: #{tpu_custom_call.1} parent=1 // loop_exit
      _
    %381 = vsyncpa [#allocation3], 1
    %s382 = scalar_lea.sflag [#allocation3], 1
    %383 = vsyncpa %s382, 1

</llo_original>
